<compile_context>
chip_gen: v5e
topology: v5e:2x2
jax: 0.10.0
libtpu: 0.0.40
codegen_flags: <defaults>
</compile_context>

<pallas_src>
import jax
import jax.numpy as jnp
import numpy as np
from jax.experimental import pallas as pl
from jax.experimental.pallas import tpu as pltpu


def _round_up(a, m):
    return ((a + m - 1) // m) * m


def _disc_kernel(x_ref, v_ref, w1_ref, b1_ref, w2_ref, b2_ref, out_ref,
                 x_ext, h_ext, y_acc, n_acc):
    # x_ref : (BB, TT, D)    input frames for this (batch, time) block
    # v_ref : (BB, TT)       valid mask in {0,1} (1 = keep)
    # w1_ref: (K, D, C)      emb conv weight (tap-major)
    # b1_ref: (1, C)
    # w2_ref: (K, C)         inner conv weight (out channels == 1)
    # b2_ref: (1, 1)
    # out_ref: (BB, 1)       per-sequence score (written at the last time step)
    # x_ext : (BB, HALO+TT, D) scratch: carried causal frames + current block
    # h_ext : (BB, HALO+TT, C) scratch: carried conv1 outputs + current block
    # y_acc, n_acc: (BB, 1)  running masked conv2 sum / valid-frame count
    t = pl.program_id(1)
    n_t = pl.num_programs(1)
    BB, TT, D = x_ref.shape
    K, _, C = w1_ref.shape
    KM1 = K - 1
    HALO = x_ext.shape[1] - TT          # sublane-aligned halo (>= K-1)

    @pl.when(t == 0)
    def _init():
        x_ext[:, :HALO, :] = jnp.zeros((BB, HALO, D), x_ext.dtype)
        h_ext[:, :HALO, :] = jnp.zeros((BB, HALO, C), h_ext.dtype)
        y_acc[...] = jnp.zeros_like(y_acc)
        n_acc[...] = jnp.zeros_like(n_acc)

    @pl.when(t > 0)
    def _carry():
        # carry the last HALO frames of the previous block (aligned copies)
        x_ext[:, :HALO, :] = x_ext[:, TT:TT + HALO, :]
        h_ext[:, :HALO, :] = h_ext[:, TT:TT + HALO, :]

    x_ext[:, HALO:, :] = x_ref[...]

    # --- causal Conv1d(D -> C, K): K accumulating MXU matmuls over shifted
    # in-VMEM windows (no materialized im2col; x read from HBM exactly once).
    h2 = jnp.dot(x_ext[:, HALO - KM1:HALO - KM1 + TT, :].reshape(BB * TT, D),
                 w1_ref[0], preferred_element_type=jnp.float32)
    for j in range(1, K):
        xj = x_ext[:, HALO - KM1 + j:HALO - KM1 + j + TT, :].reshape(BB * TT, D)
        h2 = h2 + jnp.dot(xj, w1_ref[j], preferred_element_type=jnp.float32)
    h2 = h2 + b1_ref[...]
    h = h2.reshape(BB, TT, C)
    h_ext[:, HALO:, :] = h

    # --- fused causal Conv1d(C -> 1, K) + masked time sum (VPU/XLU only) ---
    w2 = w2_ref[...]                                          # (K, C)
    yconv = jnp.zeros((BB, TT), jnp.float32)
    for j in range(K):
        hj = h_ext[:, HALO - KM1 + j:HALO - KM1 + j + TT, :]  # (BB, TT, C)
        yconv = yconv + jnp.sum(hj * w2[j:j + 1].reshape(1, 1, C), axis=2)
    v = v_ref[...]                                            # (BB, TT)
    n_part = jnp.sum(v, axis=1, keepdims=True)                # valid frames
    y_part = jnp.sum(v * yconv, axis=1, keepdims=True)
    y_acc[...] += y_part + b2_ref[...] * n_part
    n_acc[...] += n_part

    @pl.when(t == n_t - 1)
    def _finalize():
        # NOTE: fully padded rows (incl. batch-padding rows) divide by zero,
        # matching the PyTorch module; the wrapper slices padded rows away.
        out_ref[...] = y_acc[...] / n_acc[...]


def _choose_tiles(B, T, D, C, K):
    """Pick (BB, TT, Bp, Tp): batch/time block sizes and padded extents.

    Targets the largest BB*TT block fitting a conservative per-step VMEM
    budget (double-buffered bf16 x, f32 mask, halo scratch, f32 h and
    temporaries) while minimizing batch padding.  Time is only blocked when a
    whole padded sequence would blow the budget (then TT is a multiple of 128
    so the mask BlockSpec stays tile-legal)."""
    budget = 30 << 20                       # accounted per-step VMEM target
    per_row = 12 * C + 6 * D + 32           # ~bytes per (batch, time) element
    rows = int(min(16384, max(256, budget // per_row)))
    Tp8 = _round_up(T, 8)

    if Tp8 <= rows:                         # whole sequence in one time block
        TT = Tp8
        cap = max(1, rows // TT)
        if cap >= B:
            BB = B
            if B >= 16 and B % 16 == 0:
                BB = B // 2                 # >=2 batch blocks keep both v7x TCs busy
        else:
            cap8 = max(8, (cap // 8) * 8)   # multi-block batch => BB % 8 == 0
            BB, best_waste = 8, (-B) % 8
            for bb in range(16, cap8 + 1, 8):
                waste = (-B) % bb
                if waste <= best_waste:     # prefer bigger BB on ties
                    BB, best_waste = bb, waste
    else:                                   # long sequence: block the time axis
        BB = B if B <= 8 else 8
        TT = max(128, (rows // BB) // 128 * 128)
        TT = min(TT, _round_up(Tp8, 128))
    Bp = _round_up(B, BB)
    Tp = _round_up(Tp8, TT)
    return BB, TT, Bp, Tp


def discriminator_forward(x, padding_mask, params, *,
                          matmul_dtype=jnp.bfloat16, tiles=None):
    """x: (B, T, D); padding_mask: (B, T) bool (True = padded) -> (B,) float32.

    params = (w1, b1, w2, b2):
      w1: (K, D, C)  with w1[j] = W1_pt[:, :, j].T      b1: (C,)
      w2: (K, C, 1)  with w2[j] = W2_pt[:, :, j].T      b2: (1,)
    matmul_dtype: dtype of x / w1 fed to the MXU (bf16 default: half the HBM
    bytes on the dominant operand + 2x MXU rate; accumulation stays f32).
    """
    w1, b1, w2, b2 = params
    B, T, D = x.shape
    K, _, C = w1.shape

    if padding_mask is None:
        padding_mask = jnp.zeros((B, T), dtype=bool)

    if tiles is None:
        BB, TT, Bp, Tp = _choose_tiles(B, T, D, C, K)
    else:
        BB, TT = tiles
        Bp, Tp = _round_up(B, BB), _round_up(_round_up(T, 8), TT)
    NB, NT = Bp // BB, Tp // TT
    assert TT % 8 == 0 and (NT == 1 or TT % 128 == 0)
    assert NB == 1 or BB % 8 == 0
    assert TT >= K - 1
    HALO = max(8, _round_up(K - 1, 8))      # sublane-aligned causal halo

    xq = x.astype(matmul_dtype)             # cast BEFORE padding (fewer bytes)
    xq = jnp.pad(xq, ((0, Bp - B), (0, Tp - T), (0, 0)))
    v = 1.0 - padding_mask[:, :T].astype(jnp.float32)     # 1 = keep
    v = jnp.pad(v, ((0, Bp - B), (0, Tp - T)))

    w1_ = w1.astype(matmul_dtype)                          # (K, D, C)
    b1_ = b1.reshape(1, C).astype(jnp.float32)
    w2_ = w2.reshape(K, C).astype(jnp.float32)
    b2_ = b2.reshape(1, 1).astype(jnp.float32)

    out = pl.pallas_call(
        _disc_kernel,
        out_shape=jax.ShapeDtypeStruct((Bp, 1), jnp.float32),
        grid_spec=pltpu.PrefetchScalarGridSpec(
            num_scalar_prefetch=0,
            grid=(NB, NT),
            in_specs=[
                pl.BlockSpec((BB, TT, D), lambda b, t: (b, t, 0)),  # x
                pl.BlockSpec((BB, TT), lambda b, t: (b, t)),        # valid mask
                pl.BlockSpec((K, D, C), lambda b, t: (0, 0, 0)),    # w1
                pl.BlockSpec((1, C), lambda b, t: (0, 0)),          # b1
                pl.BlockSpec((K, C), lambda b, t: (0, 0)),          # w2
                pl.BlockSpec((1, 1), lambda b, t: (0, 0)),          # b2
            ],
            # Written once per batch block (at the last time step), so this
            # 1-lane-wide block costs a single masked store per sequence block.
            out_specs=pl.BlockSpec((BB, 1), lambda b, t: (b, 0)),
            scratch_shapes=[
                pltpu.VMEM((BB, HALO + TT, D), matmul_dtype),   # x halo buffer
                pltpu.VMEM((BB, HALO + TT, C), jnp.float32),    # h halo buffer
                pltpu.VMEM((BB, 1), jnp.float32),               # masked-sum acc
                pltpu.VMEM((BB, 1), jnp.float32),               # valid-count acc
            ],
        ),
        compiler_params=pltpu.CompilerParams(
            dimension_semantics=("parallel", "arbitrary"),
            vmem_limit_bytes=48 * 1024 * 1024),
    )(xq, v, w1_, b1_, w2_, b2_)
    return out.reshape(Bp)[:B]


def ref_forward(x, padding_mask, params):
    """Pure-JAX reference of the same causal-conv discriminator."""
    w1, b1, w2, b2 = params
    B, T, D = x.shape
    K, _, C = w1.shape
    hp = jax.lax.Precision.HIGHEST
    x_pad = jnp.pad(x, ((0, 0), (K - 1, 0), (0, 0)))
    h = b1[None, None, :] + sum(
        jnp.einsum('btd,dc->btc', x_pad[:, j:j + T], w1[j], precision=hp)
        for j in range(K))
    h_pad = jnp.pad(h, ((0, 0), (K - 1, 0), (0, 0)))
    y = b2.reshape(1, 1, 1) + sum(
        jnp.einsum('btc,co->bto', h_pad[:, j:j + T], w2[j], precision=hp)
        for j in range(K))
    y = y[..., 0]                                   # (B, T)
    m = padding_mask.astype(jnp.float32)
    y = y * (1.0 - m)
    x_sz = T - m.sum(-1)
    return y.sum(-1) / x_sz


if __name__ == "__main__":
    def make_case(key, B, T, D, C, K):
        k1, k2, k3, k4, k5, k6 = jax.random.split(key, 6)
        x = jax.random.normal(k1, (B, T, D), jnp.float32)
        w1 = jax.random.normal(k2, (K, D, C), jnp.float32) / np.sqrt(D * K)
        b1 = jax.random.normal(k3, (C,), jnp.float32) * 0.01
        w2 = jax.random.normal(k4, (K, C, 1), jnp.float32) / np.sqrt(C * K)
        b2 = jax.random.normal(k5, (1,), jnp.float32) * 0.01
        lens = jax.random.randint(k6, (B,), T // 2, T + 1)
        padding_mask = jnp.arange(T)[None, :] >= lens[:, None]
        return x, padding_mask, (w1, b1, w2, b2)

    # Case 1: tiny shapes, single-block grid; check f32 (tight) and bf16 (loose).
    x, pm, params = make_case(jax.random.PRNGKey(0), B=2, T=16, D=32, C=64, K=3)
    ref = np.asarray(ref_forward(x, pm, params))
    out32 = jax.block_until_ready(
        discriminator_forward(x, pm, params, matmul_dtype=jnp.float32))
    assert out32.shape == (2,)
    assert np.allclose(np.asarray(out32), ref, rtol=1e-4, atol=1e-4), (out32, ref)
    out16 = jax.block_until_ready(discriminator_forward(x, pm, params))
    assert np.allclose(np.asarray(out16), ref, rtol=3e-2, atol=3e-2), (out16, ref)

    # Case 2: forced multi-block grid (2 batch blocks x 3 time blocks) to
    # exercise batch padding and the causal x/h carry across time blocks.
    x, pm, params = make_case(jax.random.PRNGKey(1), B=12, T=300, D=32, C=64, K=3)
    ref = np.asarray(ref_forward(x, pm, params))
    out32 = jax.block_until_ready(
        discriminator_forward(x, pm, params, matmul_dtype=jnp.float32,
                              tiles=(8, 128)))
    assert np.allclose(np.asarray(out32), ref, rtol=1e-4, atol=1e-4), (out32, ref)
    out16 = jax.block_until_ready(
        discriminator_forward(x, pm, params, tiles=(8, 128)))
    assert np.allclose(np.asarray(out16), ref, rtol=3e-2, atol=3e-2), (out16, ref)

    print("KERNEL_OK")
</pallas_src>

<mosaic_0001>
module attributes {stable_mosaic.version = 11 : i64} {
  func.func @_disc_kernel(%arg0: i32, %arg1: i32, %arg2: memref<2x16x32xf32, #tpu.memory_space<vmem>>, %arg3: memref<2x16xf32, #tpu.memory_space<vmem>>, %arg4: memref<3x32x64xf32, #tpu.memory_space<vmem>>, %arg5: memref<1x64xf32, #tpu.memory_space<vmem>>, %arg6: memref<3x64xf32, #tpu.memory_space<vmem>>, %arg7: memref<1x1xf32, #tpu.memory_space<vmem>>, %arg8: memref<2x1xf32, #tpu.memory_space<vmem>>, %arg9: memref<2x24x32xf32, #tpu.memory_space<vmem>>, %arg10: memref<2x24x64xf32, #tpu.memory_space<vmem>>, %arg11: memref<2x1xf32, #tpu.memory_space<vmem>>, %arg12: memref<2x1xf32, #tpu.memory_space<vmem>>) attributes {dimension_semantics = [#tpu.dimension_semantics<parallel>, #tpu.dimension_semantics<arbitrary>], iteration_bounds = array<i64: 1, 1>, scalar_prefetch = 0 : i64, scratch_operands = 4 : i64, tpu.core_type = #tpu.core_type<tc>, window_params = [{transform_indices = @transform_0, window_bounds = array<i64: 2, 16, 32>}, {transform_indices = @transform_1, window_bounds = array<i64: 2, 16>}, {pipeline_mode = #tpu.pipeline_mode<synchronous>, transform_indices = @transform_2, window_bounds = array<i64: 3, 32, 64>}, {pipeline_mode = #tpu.pipeline_mode<synchronous>, transform_indices = @transform_3, window_bounds = array<i64: 1, 64>}, {pipeline_mode = #tpu.pipeline_mode<synchronous>, transform_indices = @transform_4, window_bounds = array<i64: 3, 64>}, {pipeline_mode = #tpu.pipeline_mode<synchronous>, transform_indices = @transform_5, window_bounds = array<i64: 1, 1>}, {transform_indices = @transform_6, window_bounds = array<i64: 2, 1>}]} {
    %c0_i32 = arith.constant 0 : i32
    %0 = arith.cmpi eq, %arg1, %c0_i32 : i32
    %1 = arith.extui %0 : i1 to i32
    %c0_i32_0 = arith.constant 0 : i32
    %2 = arith.cmpi ne, %1, %c0_i32_0 : i32
    scf.if %2 {
      %cst_59 = arith.constant 0.000000e+00 : f32
      %72 = vector.broadcast %cst_59 : f32 to vector<2x8x32xf32>
      %c0_60 = arith.constant 0 : index
      %c0_61 = arith.constant 0 : index
      %c0_62 = arith.constant 0 : index
      %73 = vector.load %arg9[%c0_60, %c0_61, %c0_62] : memref<2x24x32xf32, #tpu.memory_space<vmem>>, vector<2x8x32xf32>
      tpu.vector_store %arg9[%c0_60, %c0_61, %c0_62], %72 {strides = array<i32>} : memref<2x24x32xf32, #tpu.memory_space<vmem>>, vector<2x8x32xf32>,
      %cst_63 = arith.constant 0.000000e+00 : f32
      %74 = vector.broadcast %cst_63 : f32 to vector<2x8x64xf32>
      %c0_64 = arith.constant 0 : index
      %c0_65 = arith.constant 0 : index
      %c0_66 = arith.constant 0 : index
      %75 = vector.load %arg10[%c0_64, %c0_65, %c0_66] : memref<2x24x64xf32, #tpu.memory_space<vmem>>, vector<2x8x64xf32>
      tpu.vector_store %arg10[%c0_64, %c0_65, %c0_66], %74 {strides = array<i32>} : memref<2x24x64xf32, #tpu.memory_space<vmem>>, vector<2x8x64xf32>,
      %cst_67 = arith.constant 0.000000e+00 : f32
      %76 = vector.broadcast %cst_67 : f32 to vector<2x1xf32>
      %c0_68 = arith.constant 0 : index
      %c0_69 = arith.constant 0 : index
      %77 = vector.load %arg11[%c0_68, %c0_69] : memref<2x1xf32, #tpu.memory_space<vmem>>, vector<2x1xf32>
      tpu.vector_store %arg11[%c0_68, %c0_69], %76 {strides = array<i32>} : memref<2x1xf32, #tpu.memory_space<vmem>>, vector<2x1xf32>,
      %cst_70 = arith.constant 0.000000e+00 : f32
      %78 = vector.broadcast %cst_70 : f32 to vector<2x1xf32>
      %c0_71 = arith.constant 0 : index
      %c0_72 = arith.constant 0 : index
      %79 = vector.load %arg12[%c0_71, %c0_72] : memref<2x1xf32, #tpu.memory_space<vmem>>, vector<2x1xf32>
      tpu.vector_store %arg12[%c0_71, %c0_72], %78 {strides = array<i32>} : memref<2x1xf32, #tpu.memory_space<vmem>>, vector<2x1xf32>,
    } else {
    }
    %c0_i32_1 = arith.constant 0 : i32
    %3 = arith.cmpi sgt, %arg1, %c0_i32_1 : i32
    %4 = arith.extui %3 : i1 to i32
    %c0_i32_2 = arith.constant 0 : i32
    %5 = arith.cmpi ne, %4, %c0_i32_2 : i32
    scf.if %5 {
      %c0_59 = arith.constant 0 : index
      %c16 = arith.constant 16 : index
      %c0_60 = arith.constant 0 : index
      %72 = vector.load %arg9[%c0_59, %c16, %c0_60] : memref<2x24x32xf32, #tpu.memory_space<vmem>>, vector<2x8x32xf32>
      %c0_61 = arith.constant 0 : index
      %c0_62 = arith.constant 0 : index
      %c0_63 = arith.constant 0 : index
      %73 = vector.load %arg9[%c0_61, %c0_62, %c0_63] : memref<2x24x32xf32, #tpu.memory_space<vmem>>, vector<2x8x32xf32>
      tpu.vector_store %arg9[%c0_61, %c0_62, %c0_63], %72 {strides = array<i32>} : memref<2x24x32xf32, #tpu.memory_space<vmem>>, vector<2x8x32xf32>,
      %c0_64 = arith.constant 0 : index
      %c16_65 = arith.constant 16 : index
      %c0_66 = arith.constant 0 : index
      %74 = vector.load %arg10[%c0_64, %c16_65, %c0_66] : memref<2x24x64xf32, #tpu.memory_space<vmem>>, vector<2x8x64xf32>
      %c0_67 = arith.constant 0 : index
      %c0_68 = arith.constant 0 : index
      %c0_69 = arith.constant 0 : index
      %75 = vector.load %arg10[%c0_67, %c0_68, %c0_69] : memref<2x24x64xf32, #tpu.memory_space<vmem>>, vector<2x8x64xf32>
      tpu.vector_store %arg10[%c0_67, %c0_68, %c0_69], %74 {strides = array<i32>} : memref<2x24x64xf32, #tpu.memory_space<vmem>>, vector<2x8x64xf32>,
    } else {
    }
    %c0 = arith.constant 0 : index
    %c0_3 = arith.constant 0 : index
    %c0_4 = arith.constant 0 : index
    %6 = vector.load %arg2[%c0, %c0_3, %c0_4] : memref<2x16x32xf32, #tpu.memory_space<vmem>>, vector<2x16x32xf32>
    %c0_5 = arith.constant 0 : index
    %c8 = arith.constant 8 : index
    %c0_6 = arith.constant 0 : index
    %7 = vector.load %arg9[%c0_5, %c8, %c0_6] : memref<2x24x32xf32, #tpu.memory_space<vmem>>, vector<2x16x32xf32>
    tpu.vector_store %arg9[%c0_5, %c8, %c0_6], %6 {strides = array<i32>} : memref<2x24x32xf32, #tpu.memory_space<vmem>>, vector<2x16x32xf32>,
    %c0_7 = arith.constant 0 : index
    %c6 = arith.constant 6 : index
    %c0_8 = arith.constant 0 : index
    %8 = vector.load %arg9[%c0_7, %c6, %c0_8] : memref<2x24x32xf32, #tpu.memory_space<vmem>>, vector<2x16x32xf32>
    %9 = vector.shape_cast %8 : vector<2x16x32xf32> to vector<32x32xf32>
    %c0_9 = arith.constant 0 : index
    %c0_10 = arith.constant 0 : index
    %c0_11 = arith.constant 0 : index
    %10 = vector.load %arg4[%c0_9, %c0_10, %c0_11] : memref<3x32x64xf32, #tpu.memory_space<vmem>>, vector<1x32x64xf32>
    %11 = vector.shape_cast %10 : vector<1x32x64xf32> to vector<32x64xf32>
    %cst = arith.constant dense<0.000000e+00> : vector<32x64xf32>
    %12 = tpu.matmul %9, %11, %cst {dimension_numbers = #tpu.dot_dimension_numbers<[1], [0], [0], [1], [0, 0, 1, 1], [], []>} : vector<32x32xf32>, vector<32x64xf32>, vector<32x64xf32> -> vector<32x64xf32>
    %c0_12 = arith.constant 0 : index
    %c7 = arith.constant 7 : index
    %c0_13 = arith.constant 0 : index
    %13 = vector.load %arg9[%c0_12, %c7, %c0_13] : memref<2x24x32xf32, #tpu.memory_space<vmem>>, vector<2x16x32xf32>
    %14 = vector.shape_cast %13 : vector<2x16x32xf32> to vector<32x32xf32>
    %c1 = arith.constant 1 : index
    %c0_14 = arith.constant 0 : index
    %c0_15 = arith.constant 0 : index
    %15 = vector.load %arg4[%c1, %c0_14, %c0_15] : memref<3x32x64xf32, #tpu.memory_space<vmem>>, vector<1x32x64xf32>
    %16 = vector.shape_cast %15 : vector<1x32x64xf32> to vector<32x64xf32>
    %cst_16 = arith.constant dense<0.000000e+00> : vector<32x64xf32>
    %17 = tpu.matmul %14, %16, %cst_16 {dimension_numbers = #tpu.dot_dimension_numbers<[1], [0], [0], [1], [0, 0, 1, 1], [], []>} : vector<32x32xf32>, vector<32x64xf32>, vector<32x64xf32> -> vector<32x64xf32>
    %18 = arith.addf %12, %17 : vector<32x64xf32>
    %c0_17 = arith.constant 0 : index
    %c8_18 = arith.constant 8 : index
    %c0_19 = arith.constant 0 : index
    %19 = vector.load %arg9[%c0_17, %c8_18, %c0_19] : memref<2x24x32xf32, #tpu.memory_space<vmem>>, vector<2x16x32xf32>
    %20 = vector.shape_cast %19 : vector<2x16x32xf32> to vector<32x32xf32>
    %c2 = arith.constant 2 : index
    %c0_20 = arith.constant 0 : index
    %c0_21 = arith.constant 0 : index
    %21 = vector.load %arg4[%c2, %c0_20, %c0_21] : memref<3x32x64xf32, #tpu.memory_space<vmem>>, vector<1x32x64xf32>
    %22 = vector.shape_cast %21 : vector<1x32x64xf32> to vector<32x64xf32>
    %cst_22 = arith.constant dense<0.000000e+00> : vector<32x64xf32>
    %23 = tpu.matmul %20, %22, %cst_22 {dimension_numbers = #tpu.dot_dimension_numbers<[1], [0], [0], [1], [0, 0, 1, 1], [], []>} : vector<32x32xf32>, vector<32x64xf32>, vector<32x64xf32> -> vector<32x64xf32>
    %24 = arith.addf %18, %23 : vector<32x64xf32>
    %c0_23 = arith.constant 0 : index
    %c0_24 = arith.constant 0 : index
    %25 = vector.load %arg5[%c0_23, %c0_24] : memref<1x64xf32, #tpu.memory_space<vmem>>, vector<1x64xf32>
    %26 = vector.broadcast %25 : vector<1x64xf32> to vector<32x64xf32>
    %27 = arith.addf %24, %26 : vector<32x64xf32>
    %28 = vector.shape_cast %27 : vector<32x64xf32> to vector<2x16x64xf32>
    %c0_25 = arith.constant 0 : index
    %c8_26 = arith.constant 8 : index
    %c0_27 = arith.constant 0 : index
    %29 = vector.load %arg10[%c0_25, %c8_26, %c0_27] : memref<2x24x64xf32, #tpu.memory_space<vmem>>, vector<2x16x64xf32>
    tpu.vector_store %arg10[%c0_25, %c8_26, %c0_27], %28 {strides = array<i32>} : memref<2x24x64xf32, #tpu.memory_space<vmem>>, vector<2x16x64xf32>,
    %c0_28 = arith.constant 0 : index
    %c0_29 = arith.constant 0 : index
    %30 = vector.load %arg6[%c0_28, %c0_29] : memref<3x64xf32, #tpu.memory_space<vmem>>, vector<3x64xf32>
    %cst_30 = arith.constant 0.000000e+00 : f32
    %31 = vector.broadcast %cst_30 : f32 to vector<2x16xf32>
    %c0_31 = arith.constant 0 : index
    %c6_32 = arith.constant 6 : index
    %c0_33 = arith.constant 0 : index
    %32 = vector.load %arg10[%c0_31, %c6_32, %c0_33] : memref<2x24x64xf32, #tpu.memory_space<vmem>>, vector<2x16x64xf32>
    %33 = vector.extract_strided_slice %30 {offsets = [0, 0], sizes = [1, 64], strides = [1, 1]} : vector<3x64xf32> to vector<1x64xf32>
    %34 = vector.shape_cast %33 : vector<1x64xf32> to vector<1x1x64xf32>
    %35 = vector.broadcast %34 : vector<1x1x64xf32> to vector<2x16x64xf32>
    %36 = arith.mulf %32, %35 : vector<2x16x64xf32>
    %cst_34 = arith.constant dense<0.000000e+00> : vector<2x16xf32>
    %37 = vector.multi_reduction <add>, %36, %cst_34 [2] : vector<2x16x64xf32> to vector<2x16xf32>
    %38 = arith.addf %31, %37 : vector<2x16xf32>
    %c0_35 = arith.constant 0 : index
    %c7_36 = arith.constant 7 : index
    %c0_37 = arith.constant 0 : index
    %39 = vector.load %arg10[%c0_35, %c7_36, %c0_37] : memref<2x24x64xf32, #tpu.memory_space<vmem>>, vector<2x16x64xf32>
    %40 = vector.extract_strided_slice %30 {offsets = [1, 0], sizes = [1, 64], strides = [1, 1]} : vector<3x64xf32> to vector<1x64xf32>
    %41 = vector.shape_cast %40 : vector<1x64xf32> to vector<1x1x64xf32>
    %42 = vector.broadcast %41 : vector<1x1x64xf32> to vector<2x16x64xf32>
    %43 = arith.mulf %39, %42 : vector<2x16x64xf32>
    %cst_38 = arith.constant dense<0.000000e+00> : vector<2x16xf32>
    %44 = vector.multi_reduction <add>, %43, %cst_38 [2] : vector<2x16x64xf32> to vector<2x16xf32>
    %45 = arith.addf %38, %44 : vector<2x16xf32>
    %c0_39 = arith.constant 0 : index
    %c8_40 = arith.constant 8 : index
    %c0_41 = arith.constant 0 : index
    %46 = vector.load %arg10[%c0_39, %c8_40, %c0_41] : memref<2x24x64xf32, #tpu.memory_space<vmem>>, vector<2x16x64xf32>
    %47 = vector.extract_strided_slice %30 {offsets = [2, 0], sizes = [1, 64], strides = [1, 1]} : vector<3x64xf32> to vector<1x64xf32>
    %48 = vector.shape_cast %47 : vector<1x64xf32> to vector<1x1x64xf32>
    %49 = vector.broadcast %48 : vector<1x1x64xf32> to vector<2x16x64xf32>
    %50 = arith.mulf %46, %49 : vector<2x16x64xf32>
    %cst_42 = arith.constant dense<0.000000e+00> : vector<2x16xf32>
    %51 = vector.multi_reduction <add>, %50, %cst_42 [2] : vector<2x16x64xf32> to vector<2x16xf32>
    %52 = arith.addf %45, %51 : vector<2x16xf32>
    %c0_43 = arith.constant 0 : index
    %c0_44 = arith.constant 0 : index
    %53 = vector.load %arg3[%c0_43, %c0_44] : memref<2x16xf32, #tpu.memory_space<vmem>>, vector<2x16xf32>
    %cst_45 = arith.constant dense<0.000000e+00> : vector<2xf32>
    %54 = vector.multi_reduction <add>, %53, %cst_45 [1] : vector<2x16xf32> to vector<2xf32>
    %55 = vector.shape_cast %54 : vector<2xf32> to vector<2x1xf32>
    %56 = arith.mulf %53, %52 : vector<2x16xf32>
    %cst_46 = arith.constant dense<0.000000e+00> : vector<2xf32>
    %57 = vector.multi_reduction <add>, %56, %cst_46 [1] : vector<2x16xf32> to vector<2xf32>
    %58 = vector.shape_cast %57 : vector<2xf32> to vector<2x1xf32>
    %c0_47 = arith.constant 0 : index
    %c0_48 = arith.constant 0 : index
    %59 = vector.load %arg11[%c0_47, %c0_48] : memref<2x1xf32, #tpu.memory_space<vmem>>, vector<2x1xf32>
    %c0_49 = arith.constant 0 : index
    %c0_50 = arith.constant 0 : index
    %60 = vector.load %arg7[%c0_49, %c0_50] : memref<1x1xf32, #tpu.memory_space<vmem>>, vector<1x1xf32>
    %61 = vector.broadcast %60 : vector<1x1xf32> to vector<2x1xf32>
    %62 = arith.mulf %61, %55 : vector<2x1xf32>
    %63 = arith.addf %58, %62 : vector<2x1xf32>
    %64 = arith.addf %59, %63 : vector<2x1xf32>
    %c0_51 = arith.constant 0 : index
    %c0_52 = arith.constant 0 : index
    %65 = vector.load %arg11[%c0_51, %c0_52] : memref<2x1xf32, #tpu.memory_space<vmem>>, vector<2x1xf32>
    tpu.vector_store %arg11[%c0_51, %c0_52], %64 {strides = array<i32>} : memref<2x1xf32, #tpu.memory_space<vmem>>, vector<2x1xf32>,
    %c0_53 = arith.constant 0 : index
    %c0_54 = arith.constant 0 : index
    %66 = vector.load %arg12[%c0_53, %c0_54] : memref<2x1xf32, #tpu.memory_space<vmem>>, vector<2x1xf32>
    %67 = arith.addf %66, %55 : vector<2x1xf32>
    %c0_55 = arith.constant 0 : index
    %c0_56 = arith.constant 0 : index
    %68 = vector.load %arg12[%c0_55, %c0_56] : memref<2x1xf32, #tpu.memory_space<vmem>>, vector<2x1xf32>
    tpu.vector_store %arg12[%c0_55, %c0_56], %67 {strides = array<i32>} : memref<2x1xf32, #tpu.memory_space<vmem>>, vector<2x1xf32>,
    %c0_i32_57 = arith.constant 0 : i32
    %69 = arith.cmpi eq, %arg1, %c0_i32_57 : i32
    %70 = arith.extui %69 : i1 to i32
    %c0_i32_58 = arith.constant 0 : i32
    %71 = arith.cmpi ne, %70, %c0_i32_58 : i32
    scf.if %71 {
      %c0_59 = arith.constant 0 : index
      %c0_60 = arith.constant 0 : index
      %72 = vector.load %arg11[%c0_59, %c0_60] : memref<2x1xf32, #tpu.memory_space<vmem>>, vector<2x1xf32>
      %c0_61 = arith.constant 0 : index
      %c0_62 = arith.constant 0 : index
      %73 = vector.load %arg12[%c0_61, %c0_62] : memref<2x1xf32, #tpu.memory_space<vmem>>, vector<2x1xf32>
      %74 = arith.divf %72, %73 : vector<2x1xf32>
      %c0_63 = arith.constant 0 : index
      %c0_64 = arith.constant 0 : index
      %75 = vector.load %arg8[%c0_63, %c0_64] : memref<2x1xf32, #tpu.memory_space<vmem>>, vector<2x1xf32>
      tpu.vector_store %arg8[%c0_63, %c0_64], %74 {strides = array<i32>} : memref<2x1xf32, #tpu.memory_space<vmem>>, vector<2x1xf32>,
    } else {
    }
    return
  }
  func.func @transform_0(%arg0: i32, %arg1: i32) -> (i32, i32, i32) {
    %c0_i32 = arith.constant 0 : i32
    %c0_i32_0 = arith.constant 0 : i32
    return %arg0, %arg1, %c0_i32 : i32, i32, i32
  }
  func.func @transform_1(%arg0: i32, %arg1: i32) -> (i32, i32) {
    %c0_i32 = arith.constant 0 : i32
    return %arg0, %arg1 : i32, i32
  }
  func.func @transform_2(%arg0: i32, %arg1: i32) -> (i32, i32, i32) {
    %c0_i32 = arith.constant 0 : i32
    %c0_i32_0 = arith.constant 0 : i32
    %c0_i32_1 = arith.constant 0 : i32
    %c0_i32_2 = arith.constant 0 : i32
    return %c0_i32, %c0_i32_0, %c0_i32_1 : i32, i32, i32
  }
  func.func @transform_3(%arg0: i32, %arg1: i32) -> (i32, i32) {
    %c0_i32 = arith.constant 0 : i32
    %c0_i32_0 = arith.constant 0 : i32
    %c0_i32_1 = arith.constant 0 : i32
    return %c0_i32, %c0_i32_0 : i32, i32
  }
  func.func @transform_4(%arg0: i32, %arg1: i32) -> (i32, i32) {
    %c0_i32 = arith.constant 0 : i32
    %c0_i32_0 = arith.constant 0 : i32
    %c0_i32_1 = arith.constant 0 : i32
    return %c0_i32, %c0_i32_0 : i32, i32
  }
  func.func @transform_5(%arg0: i32, %arg1: i32) -> (i32, i32) {
    %c0_i32 = arith.constant 0 : i32
    %c0_i32_0 = arith.constant 0 : i32
    %c0_i32_1 = arith.constant 0 : i32
    return %c0_i32, %c0_i32_0 : i32, i32
  }
  func.func @transform_6(%arg0: i32, %arg1: i32) -> (i32, i32) {
    %c0_i32 = arith.constant 0 : i32
    %c0_i32_0 = arith.constant 0 : i32
    return %arg0, %c0_i32 : i32, i32
  }
}

</mosaic_0001>

<llo_original>
// kernel: tpu_custom_call.1
$region0: #{tpu_custom_call.1}
  #allocation0 [shape = 'u32[]', space=smem, size = 0x4, offset = 0x4, fixed_abs, tag = 'smem constant byte address 0x4 - core index']
  #allocation1 [shape = 'u32[72,128]{1,0:T(1,128)}', space=vmem, size = 0x9000, scoped, tag = 'internal scratch']
  #allocation2 [shape = 'f32[2,24,32]{2,1,0:T(8,128)}', space=vmem, size = 0x6000, scoped, tag = 'scratch operand']
  #allocation3 [shape = 'f32[2,24,64]{2,1,0:T(8,128)}', space=vmem, size = 0x6000, scoped, tag = 'scratch operand']
  #allocation4 [shape = 'f32[2,1]{1,0:T(2,128)}', space=vmem, size = 0x400, scoped, tag = 'scratch operand']
  #allocation5 [shape = 'f32[2,1]{1,0:T(2,128)}', space=vmem, size = 0x400, scoped, tag = 'scratch operand']
  #allocation6 [shape = 'f32[1,1]{1,0:T(1,128)S(1)}', space=vmem, size = 0x200, scoped, tag = 'scoped memory for tpu_custom_call.1']
  %s0 = inlined_call_operand.hbm [shape: f32[2,16,32], index: 0, kind: input, shape index: {}]
  %s1 = inlined_call_operand.hbm [shape: f32[2,16], index: 1, kind: input, shape index: {}]
  %s2 = inlined_call_operand.hbm [shape: f32[3,32,64], index: 2, kind: input, shape index: {}]
  %s3 = inlined_call_operand.vmem [shape: f32[1,64], index: 3, kind: input, shape index: {}]
  %s4 = inlined_call_operand.vmem [shape: f32[3,64], index: 4, kind: input, shape index: {}]
  %s5 = inlined_call_operand.<no memory space> [shape: f32[1,1], index: 5, kind: input, shape index: {}]
  %s6 = inlined_call_operand.vmem [shape: f32[2,1], index: 6, kind: output, shape index: {}]
  %s7 = sld [smem:[#allocation0]]
  $region58: #{tpu_custom_call.1} parent=0
    _
  %s9 = ssub.s32 1, %s7
  %s10 = scalar_select 0, %s9, %s7
  %v11 = vstv %s5
  %12 = vst [vmem:[#allocation6] sm:$0x1] %v11
  $region1: #{tpu_custom_call.1} parent=0
    #allocation7 [shape = 'u8[16384]{0}', space=vmem, size = 0x4000, scoped, tag = 'input window, operand 0, single buffered']
    #allocation8 [shape = 's32[1]{0}', space=sflag, size = 0x4, scoped, tag = 'scoped memory for tpu_custom_call.1']
    #allocation9 [shape = 'u8[1024]{0}', space=vmem, size = 0x400, scoped, tag = 'input window, operand 1, single buffered']
    #allocation10 [shape = 's32[1]{0}', space=sflag, size = 0x4, scoped, tag = 'scoped memory for tpu_custom_call.1']
    #allocation11 [shape = 'u8[49152]{0}', space=vmem, size = 0xc000, scoped, tag = 'input window, operand 2, single buffered']
    %13 = vsyncpa [#allocation8], 0
    %14 = vsyncpa [#allocation10], 0
    // Predicated region
    $region2: #{tpu_custom_call.1} parent=1 // pred_check
      _
    $region3: #{tpu_custom_call.1} parent=1 // pred_check_branch
      %16 = sbr.rel (0) target = $region5
    $region4: #{tpu_custom_call.1} parent=1 // pred_region
      %18 = vsyncadd [#allocation8], 0
      %s19 = sshll.u32 %s0, 4
      %s20 = int_to_ptr.hbm [resolvable:$true] %s19
      %s21 = sshll.u32 [#allocation7], 4
      %s22 = int_to_ptr.vmem [resolvable:$true] %s21
      %27 = dma.hbm_to_vmem [thread:$0]  %s20, 512, %s22, [#allocation8], 128, 128, 8
    $region5: #{tpu_custom_call.1} parent=1 // pred_fallthru
      _
    // Predicated region
    $region6: #{tpu_custom_call.1} parent=1 // pred_check
      _
    $region7: #{tpu_custom_call.1} parent=1 // pred_check_branch
      %29 = sbr.rel (0) target = $region9
    $region8: #{tpu_custom_call.1} parent=1 // pred_region
      %31 = vsyncadd [#allocation10], 0
      %s33 = sshll.u32 %s1, 4
      %s34 = int_to_ptr.hbm [resolvable:$true] %s33
      %s35 = sshll.u32 [#allocation9], 4
      %s36 = int_to_ptr.vmem [resolvable:$true] %s35
      %38 = dma.hbm_to_vmem [thread:$0]  %s34, 32, %s36, [#allocation10]
    $region9: #{tpu_custom_call.1} parent=1 // pred_fallthru
      _
    // Predicated region
    $region10: #{tpu_custom_call.1} parent=1 // pred_check
      _
    $region11: #{tpu_custom_call.1} parent=1 // pred_check_branch
      %40 = sbr.rel (0) target = $region13
    $region12: #{tpu_custom_call.1} parent=1 // pred_region
      %42 = vsyncadd [#allocation10], 0
      %s43 = sshll.u32 %s2, 4
      %s44 = int_to_ptr.hbm [resolvable:$true] %s43
      %s45 = sshll.u32 [#allocation11], 4
      %s46 = int_to_ptr.vmem [resolvable:$true] %s45
      %51 = dma.hbm_to_vmem [thread:$0]  %s44, 1536, %s46, [#allocation10], 128, 128, 8
    $region13: #{tpu_custom_call.1} parent=1 // pred_fallthru
      _
    // Predicated region
    $region14: #{tpu_custom_call.1} parent=1 // pred_check
      _
    $region15: #{tpu_custom_call.1} parent=1 // pred_check_branch
      %53 = sbr.rel (0) target = $region17
    $region16: #{tpu_custom_call.1} parent=1 // pred_region
      _
    $region17: #{tpu_custom_call.1} parent=1 // pred_fallthru
      _
    // Predicated region
    $region18: #{tpu_custom_call.1} parent=1 // pred_check
      _
    $region19: #{tpu_custom_call.1} parent=1 // pred_check_branch
      %55 = sbr.rel (0) target = $region21
    $region20: #{tpu_custom_call.1} parent=1 // pred_region
      _
    $region21: #{tpu_custom_call.1} parent=1 // pred_fallthru
      _
    // Predicated region
    $region22: #{tpu_custom_call.1} parent=1 // pred_check
      _
    $region23: #{tpu_custom_call.1} parent=1 // pred_check_branch
      %57 = sbr.rel (0) target = $region25
    $region24: #{tpu_custom_call.1} parent=1 // pred_region
      _
    $region25: #{tpu_custom_call.1} parent=1 // pred_fallthru
      _
    // Predicated region
    $region26: #{tpu_custom_call.1} parent=1 // pred_check
      _
    $region27: #{tpu_custom_call.1} parent=1 // pred_check_branch
      %59 = sbr.rel (0) target = $region29
    $region28: #{tpu_custom_call.1} parent=1 // pred_region
      %61 = dma.done [#allocation8], 512
    $region29: #{tpu_custom_call.1} parent=1 // pred_fallthru
      _
    // Predicated region
    $region30: #{tpu_custom_call.1} parent=1 // pred_check
      _
    $region31: #{tpu_custom_call.1} parent=1 // pred_check_branch
      %63 = sbr.rel (0) target = $region33
    $region32: #{tpu_custom_call.1} parent=1 // pred_region
      %65 = dma.done [#allocation10], 32
    $region33: #{tpu_custom_call.1} parent=1 // pred_fallthru
      _
    // Predicated region
    $region34: #{tpu_custom_call.1} parent=1 // pred_check
      _
    $region35: #{tpu_custom_call.1} parent=1 // pred_check_branch
      %67 = sbr.rel (0) target = $region37
    $region36: #{tpu_custom_call.1} parent=1 // pred_region
      %69 = dma.done [#allocation10], 1536
    $region37: #{tpu_custom_call.1} parent=1 // pred_fallthru
      _
    %p70 = scmp.eq.s32.totalorder 0, 0
    // Predicated region
    $region38: #{tpu_custom_call.1} parent=1 // pred_check
      %p71 = pneg %p70
    $region39: #{tpu_custom_call.1} parent=1 // pred_check_branch
      %73 = sbr.rel (%p71) target = $region41
    $region40: #{tpu_custom_call.1} parent=1 // pred_region
      %vm74 = vcmask 261120
      %75 = vst.msk [vmem:[#allocation2] sm:$0xff] %vm74, 0.0
      %76 = vst.msk [vmem:[#allocation2 + $0x18] sm:$0xff] %vm74, 0.0
      %vm77 = vcmask 523264
      %78 = vst.msk [vmem:[#allocation3] sm:$0xff] %vm77, 0.0
      %79 = vst.msk [vmem:[#allocation3 + $0x18] sm:$0xff] %vm77, 0.0
      %vm80 = vcmask 1024
      %81 = vst.msk [vmem:[#allocation4] sm:$0x3] %vm80, 0.0
      %82 = vst.msk [vmem:[#allocation5] sm:$0x3] %vm80, 0.0
    $region41: #{tpu_custom_call.1} parent=1 // pred_fallthru
      _
    %p83 = scmp.gt.s32.totalorder 0, 0
    // Predicated region
    $region42: #{tpu_custom_call.1} parent=1 // pred_check
      %p84 = pneg %p83
    $region43: #{tpu_custom_call.1} parent=1 // pred_check_branch
      %86 = sbr.rel (%p84) target = $region45
    $region44: #{tpu_custom_call.1} parent=1 // pred_region
      %v87 = vld [vmem:[#allocation2 + $0x10] sm:$0xff]
      %v88 = vld [vmem:[#allocation2 + $0x28] sm:$0xff]
      %vm89 = vcmask 261120
      %90 = vst.msk [vmem:[#allocation2] sm:$0xff] %vm89, %v87
      %91 = vst.msk [vmem:[#allocation2 + $0x18] sm:$0xff] %vm89, %v88
      %v92 = vld [vmem:[#allocation3 + $0x10] sm:$0xff]
      %v93 = vld [vmem:[#allocation3 + $0x28] sm:$0xff]
      %vm94 = vcmask 523264
      %95 = vst.msk [vmem:[#allocation3] sm:$0xff] %vm94, %v92
      %96 = vst.msk [vmem:[#allocation3 + $0x18] sm:$0xff] %vm94, %v93
    $region45: #{tpu_custom_call.1} parent=1 // pred_fallthru
      _
    %v97 = vld [vmem:[#allocation7] sm:$0xff]
    %v98 = vld [vmem:[#allocation7 + $0x8] sm:$0xff]
    %v99 = vld [vmem:[#allocation7 + $0x10] sm:$0xff]
    %v100 = vld [vmem:[#allocation7 + $0x18] sm:$0xff]
    %vm101 = vcmask 261120
    %102 = vst.msk [vmem:[#allocation2 + $0x8] sm:$0xff] %vm101, %v97
    %103 = vst.msk [vmem:[#allocation2 + $0x10] sm:$0xff] %vm101, %v98
    %104 = vst.msk [vmem:[#allocation2 + $0x20] sm:$0xff] %vm101, %v99
    %105 = vst.msk [vmem:[#allocation2 + $0x28] sm:$0xff] %vm101, %v100
    %v106 = vld [vmem:[#allocation2 + $0x6] sm:$0xff]
    %v107 = vld [vmem:[#allocation2 + $0xe] sm:$0xff]
    %v108 = vld [vmem:[#allocation2 + $0x1e] sm:$0xff]
    %v109 = vld [vmem:[#allocation2 + $0x26] sm:$0xff]
    %v110 = vld [vmem:[#allocation11] sm:$0xff]
    %v111 = vld [vmem:[#allocation11 + $0x8] sm:$0xff]
    %v112 = vld [vmem:[#allocation11 + $0x10] sm:$0xff]
    %v113 = vld [vmem:[#allocation11 + $0x18] sm:$0xff]
    %v114 = vld [vmem:[#allocation2 + $0x7] sm:$0xff]
    %v115 = vld [vmem:[#allocation2 + $0xf] sm:$0xff]
    %v116 = vld [vmem:[#allocation2 + $0x1f] sm:$0xff]
    %v117 = vld [vmem:[#allocation2 + $0x27] sm:$0xff]
    %s118 = scalar_lea.vmem [#allocation11], 32
    %v119 = vld [vmem:[%s118] sm:$0xff]
    %v120 = vld [vmem:[%s118 + $0x8] sm:$0xff]
    %v121 = vld [vmem:[%s118 + $0x10] sm:$0xff]
    %v122 = vld [vmem:[%s118 + $0x18] sm:$0xff]
    %v124 = vsel %vm101, %v114, 0
    %v127 = vsel %vm101, %v115, 0
    %v130 = vsel %vm101, %v116, 0
    %v133 = vsel %vm101, %v117, 0
    %135 = vmatpush.msra.mxu0 0.0
    %136 = vmatpush.msra.mxu0 0.0
    %137 = vmatpush.msra.mxu0 0.0
    %138 = vmatpush.msra.mxu0 0.0
    %139 = vmatpush.msra.mxu0 0.0
    %140 = vmatpush.msra.mxu0 0.0
    %141 = vmatpush.msra.mxu0 0.0
    %142 = vmatpush.msra.mxu0 0.0
    %143 = vmatpush.msra.mxu0 0.0
    %144 = vmatpush.msra.mxu0 0.0
    %145 = vmatpush.msra.mxu0 0.0
    %146 = vmatpush.msra.mxu0 0.0
    %147 = vmatpush.msra.mxu0 %v122
    %148 = vmatpush.msra.mxu0 %v121
    %149 = vmatpush.msra.mxu0 %v120
    %150 = vmatpush.msra.mxu0 %v119
    %151 = vmatmul.f32.gmra.mxu0 %v124
    %v152 = vpop.f32.mrf.mxu0
    %v153 = vadd.f32 0.0, %v152
    %154 = vmatmul.f32.gmra.mxu0 %v127
    %v155 = vpop.f32.mrf.mxu0
    %v156 = vadd.f32 0.0, %v155
    %157 = vmatmul.f32.gmra.mxu0 %v130
    %v158 = vpop.f32.mrf.mxu0
    %v159 = vadd.f32 0.0, %v158
    %160 = vmatmul.f32.gmra.mxu0 %v133
    %v161 = vpop.f32.mrf.mxu0
    %v162 = vadd.f32 0.0, %v161
    %163 = vdwg.mxu0
    %v165 = vsel %vm101, %v106, 0
    %v168 = vsel %vm101, %v107, 0
    %v171 = vsel %vm101, %v108, 0
    %v174 = vsel %vm101, %v109, 0
    %176 = vmatpush.msra.mxu0 0.0
    %177 = vmatpush.msra.mxu0 0.0
    %178 = vmatpush.msra.mxu0 0.0
    %179 = vmatpush.msra.mxu0 0.0
    %180 = vmatpush.msra.mxu0 0.0
    %181 = vmatpush.msra.mxu0 0.0
    %182 = vmatpush.msra.mxu0 0.0
    %183 = vmatpush.msra.mxu0 0.0
    %184 = vmatpush.msra.mxu0 0.0
    %185 = vmatpush.msra.mxu0 0.0
    %186 = vmatpush.msra.mxu0 0.0
    %187 = vmatpush.msra.mxu0 0.0
    %188 = vmatpush.msra.mxu0 %v113
    %189 = vmatpush.msra.mxu0 %v112
    %190 = vmatpush.msra.mxu0 %v111
    %191 = vmatpush.msra.mxu0 %v110
    %192 = vmatmul.f32.gmra.mxu0 %v165
    %v193 = vpop.f32.mrf.mxu0
    %v194 = vadd.f32 %v153, %v193
    %195 = vmatmul.f32.gmra.mxu0 %v168
    %v196 = vpop.f32.mrf.mxu0
    %v197 = vadd.f32 %v156, %v196
    %198 = vmatmul.f32.gmra.mxu0 %v171
    %v199 = vpop.f32.mrf.mxu0
    %v200 = vadd.f32 %v159, %v199
    %201 = vmatmul.f32.gmra.mxu0 %v174
    %v202 = vpop.f32.mrf.mxu0
    %v203 = vadd.f32 %v162, %v202
    %204 = vdwg.mxu0
    %v205 = vld [vmem:[#allocation2 + $0x8] sm:$0xff]
    %v206 = vld [vmem:[#allocation2 + $0x10] sm:$0xff]
    %v207 = vld [vmem:[#allocation2 + $0x20] sm:$0xff]
    %v208 = vld [vmem:[#allocation2 + $0x28] sm:$0xff]
    %s209 = scalar_lea.vmem [#allocation11], 64
    %v210 = vld [vmem:[%s209] sm:$0xff]
    %v211 = vld [vmem:[%s209 + $0x8] sm:$0xff]
    %v212 = vld [vmem:[%s209 + $0x10] sm:$0xff]
    %v213 = vld [vmem:[%s209 + $0x18] sm:$0xff]
    %v215 = vsel %vm101, %v205, 0
    %v218 = vsel %vm101, %v206, 0
    %v221 = vsel %vm101, %v207, 0
    %v224 = vsel %vm101, %v208, 0
    %226 = vmatpush.msra.mxu0 0.0
    %227 = vmatpush.msra.mxu0 0.0
    %228 = vmatpush.msra.mxu0 0.0
    %229 = vmatpush.msra.mxu0 0.0
    %230 = vmatpush.msra.mxu0 0.0
    %231 = vmatpush.msra.mxu0 0.0
    %232 = vmatpush.msra.mxu0 0.0
    %233 = vmatpush.msra.mxu0 0.0
    %234 = vmatpush.msra.mxu0 0.0
    %235 = vmatpush.msra.mxu0 0.0
    %236 = vmatpush.msra.mxu0 0.0
    %237 = vmatpush.msra.mxu0 0.0
    %238 = vmatpush.msra.mxu0 %v213
    %239 = vmatpush.msra.mxu0 %v212
    %240 = vmatpush.msra.mxu0 %v211
    %241 = vmatpush.msra.mxu0 %v210
    %242 = vmatmul.f32.gmra.mxu0 %v215
    %v243 = vpop.f32.mrf.mxu0
    %v244 = vadd.f32 0.0, %v243
    %245 = vmatmul.f32.gmra.mxu0 %v218
    %v246 = vpop.f32.mrf.mxu0
    %v247 = vadd.f32 0.0, %v246
    %248 = vmatmul.f32.gmra.mxu0 %v221
    %v249 = vpop.f32.mrf.mxu0
    %v250 = vadd.f32 0.0, %v249
    %251 = vmatmul.f32.gmra.mxu0 %v224
    %v252 = vpop.f32.mrf.mxu0
    %v253 = vadd.f32 0.0, %v252
    %254 = vdwg.mxu0
    %v255 = vadd.f32 %v194, %v244
    %v256 = vadd.f32 %v197, %v247
    %v257 = vadd.f32 %v200, %v250
    %v258 = vadd.f32 %v203, %v253
    %v259 = vld [vmem:[%s3] sm:$0x1]
    %v261 = vperm.slane %v259, 0
    %v263 = vadd.f32 %v255, %v261
    %v264 = vadd.f32 %v256, %v261
    %v265 = vadd.f32 %v257, %v261
    %v266 = vadd.f32 %v258, %v261
    %vm267 = vcmask 523264
    %268 = vst.msk [vmem:[#allocation3 + $0x8] sm:$0xff] %vm267, %v263
    %269 = vst.msk [vmem:[#allocation3 + $0x10] sm:$0xff] %vm267, %v264
    %270 = vst.msk [vmem:[#allocation3 + $0x20] sm:$0xff] %vm267, %v265
    %271 = vst.msk [vmem:[#allocation3 + $0x28] sm:$0xff] %vm267, %v266
    %v272 = vld [vmem:[%s4] sm:$0x7]
    %v273 = vld [vmem:[#allocation3 + $0x6] sm:$0xff]
    %v274 = vld [vmem:[#allocation3 + $0xe] sm:$0xff]
    %v275 = vld [vmem:[#allocation3 + $0x1e] sm:$0xff]
    %v276 = vld [vmem:[#allocation3 + $0x26] sm:$0xff]
    %v277 = vperm.slane %v272, 0
    %v278 = vmul.f32 %v273, %v277
    %v279 = vmul.f32 %v274, %v277
    %v280 = vmul.f32 %v275, %v277
    %v281 = vmul.f32 %v276, %v277
    %v282 = vsel %vm267, %v278, 0.0
    %283 = vadd.xlane.f32.xlu0 %v282
    %v284 = vpop.xlane.xlu0 %283
    %v285 = vsel %vm267, %v279, 0.0
    %286 = vadd.xlane.f32.xlu0 %v285
    %v287 = vpop.xlane.xlu0 %286
    %v288 = vsel %vm267, %v280, 0.0
    %289 = vadd.xlane.f32.xlu0 %v288
    %v290 = vpop.xlane.xlu0 %289
    %v291 = vsel %vm267, %v281, 0.0
    %292 = vadd.xlane.f32.xlu0 %v291
    %v293 = vpop.xlane.xlu0 %292
    %v294 = vadd.f32 %v284, 0.0
    %v295 = vadd.f32 %v287, 0.0
    %v296 = vadd.f32 %v290, 0.0
    %v297 = vadd.f32 %v293, 0.0
    %v298 = vld [vmem:[#allocation3 + $0x7] sm:$0xff]
    %v299 = vld [vmem:[#allocation3 + $0xf] sm:$0xff]
    %v300 = vld [vmem:[#allocation3 + $0x1f] sm:$0xff]
    %v301 = vld [vmem:[#allocation3 + $0x27] sm:$0xff]
    %v302 = vperm.slane %v272, 1
    %v303 = vmul.f32 %v298, %v302
    %v304 = vmul.f32 %v299, %v302
    %v305 = vmul.f32 %v300, %v302
    %v306 = vmul.f32 %v301, %v302
    %v307 = vsel %vm267, %v303, 0.0
    %308 = vadd.xlane.f32.xlu0 %v307
    %v309 = vpop.xlane.xlu0 %308
    %v310 = vsel %vm267, %v304, 0.0
    %311 = vadd.xlane.f32.xlu0 %v310
    %v312 = vpop.xlane.xlu0 %311
    %v313 = vsel %vm267, %v305, 0.0
    %314 = vadd.xlane.f32.xlu0 %v313
    %v315 = vpop.xlane.xlu0 %314
    %v316 = vsel %vm267, %v306, 0.0
    %317 = vadd.xlane.f32.xlu0 %v316
    %v318 = vpop.xlane.xlu0 %317
    %v319 = vadd.f32 %v294, %v309
    %v320 = vadd.f32 %v295, %v312
    %v321 = vadd.f32 %v296, %v315
    %v322 = vadd.f32 %v297, %v318
    %v323 = vld [vmem:[#allocation3 + $0x8] sm:$0xff]
    %v324 = vld [vmem:[#allocation3 + $0x10] sm:$0xff]
    %v325 = vld [vmem:[#allocation3 + $0x20] sm:$0xff]
    %v326 = vld [vmem:[#allocation3 + $0x28] sm:$0xff]
    %v327 = vperm.slane %v272, 2
    %v328 = vmul.f32 %v323, %v327
    %v329 = vmul.f32 %v324, %v327
    %v330 = vmul.f32 %v325, %v327
    %v331 = vmul.f32 %v326, %v327
    %v332 = vsel %vm267, %v328, 0.0
    %333 = vadd.xlane.f32.xlu0 %v332
    %v334 = vpop.xlane.xlu0 %333
    %v335 = vsel %vm267, %v329, 0.0
    %336 = vadd.xlane.f32.xlu0 %v335
    %v337 = vpop.xlane.xlu0 %336
    %v338 = vsel %vm267, %v330, 0.0
    %339 = vadd.xlane.f32.xlu0 %v338
    %v340 = vpop.xlane.xlu0 %339
    %v341 = vsel %vm267, %v331, 0.0
    %342 = vadd.xlane.f32.xlu0 %v341
    %v343 = vpop.xlane.xlu0 %342
    %v344 = vadd.f32 %v319, %v334
    %v345 = vadd.f32 %v320, %v337
    %v346 = vadd.f32 %v321, %v340
    %v347 = vadd.f32 %v322, %v343
    %v348 = vld [vmem:[#allocation9] sm:$0x3]
    %vm349 = vcmask 123904
    %v350 = vsel %vm349, %v348, 0.0
    %351 = vadd.xlane.f32.xlu0 %v350
    %v352 = vpop.xlane.xlu0 %351
    %v357 = vlaneseq
    %v358 = vand.u32 %v357, 127
    %v359 = vperm.slane %v344, %v358
    %v360 = vadd.s32 %v358, 4294967288
    %v361 = vperm.slane %v345, %v360
    %vm362 = vcmask 130112
    %v363 = vsel %vm362, %v361, %v359
    %v364 = vperm.slane %v346, %v358
    %v365 = vperm.slane %v347, %v360
    %v366 = vsel %vm362, %v365, %v364
    %vm367 = vcmask 1041409
    %v368 = vsel %vm367, %v366, %v363
    %v370 = vmul.f32 %v348, %v368
    %v371 = vsel %vm349, %v370, 0.0
    %372 = vadd.xlane.f32.xlu0 %v371
    %v373 = vpop.xlane.xlu0 %372
    %v374 = vld [vmem:[#allocation4] sm:$0x3]
    %v375 = vld [vmem:[#allocation6] sm:$0x1]
    %v377 = vperm.slane %v375, 0
    %v379 = vmul.f32 %v377, %v352
    %v380 = vadd.f32 %v373, %v379
    %v381 = vadd.f32 %v374, %v380
    %vm382 = vcmask 1024
    %383 = vst.msk [vmem:[#allocation4] sm:$0x3] %vm382, %v381
    %v384 = vld [vmem:[#allocation5] sm:$0x3]
    %v385 = vadd.f32 %v384, %v352
    %386 = vst.msk [vmem:[#allocation5] sm:$0x3] %vm382, %v385
    // Predicated region
    $region46: #{tpu_custom_call.1} parent=1 // pred_check
      %p387 = pneg %p70
    $region47: #{tpu_custom_call.1} parent=1 // pred_check_branch
      %389 = sbr.rel (%p387) target = $region49
    $region48: #{tpu_custom_call.1} parent=1 // pred_region
      %v390 = vld [vmem:[#allocation4] sm:$0x3]
      %v391 = vld [vmem:[#allocation5] sm:$0x3]
      %v392 = vrcp.pop %v391
      %v393 = vmul.f32 %v391, %v392
      %v394 = vsub.f32 1.0, %v393
      %v395 = vmul.f32 %v392, %v394
      %v396 = vadd.f32 %v392, %v395
      %vm397 = vweird.f32 %v391
      %vm398 = vweird.f32 %v392
      %vm399 = vmor %vm397, %vm398
      %v400 = vsel %vm399, %v392, %v396
      %v401 = vand.u32 2147483647, %v391
      %vm402 = vcmp.eq.f32.partialorder %v401, 8.507059e+37
      %v403 = vand.u32 %v391, 2147483648
      %v404 = vor.u32 1.1754944e-38, %v403
      %v405 = vsel %vm402, %v404, %v400
      %v406 = vmul.f32 %v390, %v405
      %407 = vst.msk [vmem:[%s6] sm:$0x3] %vm382, %v406
    $region49: #{tpu_custom_call.1} parent=1 // pred_fallthru
      _
    // Predicated region
    $region50: #{tpu_custom_call.1} parent=1 // pred_check
      _
    $region51: #{tpu_custom_call.1} parent=1 // pred_check_branch
      %409 = sbr.rel (0) target = $region53
    $region52: #{tpu_custom_call.1} parent=1 // pred_region
      _
    $region53: #{tpu_custom_call.1} parent=1 // pred_fallthru
      _
    // Predicated region
    $region54: #{tpu_custom_call.1} parent=1 // pred_check
      _
    $region55: #{tpu_custom_call.1} parent=1 // pred_check_branch
      %411 = sbr.rel (0) target = $region57
    $region56: #{tpu_custom_call.1} parent=1 // pred_region
      _
    $region57: #{tpu_custom_call.1} parent=1 // pred_fallthru
      _
    %412 = vsyncpa [#allocation8], 1
    %413 = vsyncpa [#allocation10], 1

</llo_original>
